<compile_context>
chip_gen: v5e
topology: v5e:2x2
jax: 0.10.0
libtpu: 0.0.40
codegen_flags: <defaults>
</compile_context>

<pallas_src>
import functools
import math

import jax
import jax.numpy as jnp
from jax.experimental import pallas as pl
from jax.experimental.pallas import tpu as pltpu

_LANE = 128
_NCORES = 2   # leading "parallel" axis; harmless on 1-TC chips (<=1 skipped step)


def _roll_plus(x, k, axis, n):
    """out[i] = x[(i + k) mod n] along `axis` (pltpu.roll shifts forward)."""
    k = k % n
    if k == 0:
        return x
    return pltpu.roll(x, n - k, axis)


def _perceptual_loss_kernel(g_ref, t_ref, out_ref, wx_ref, wy_ref, acc_ref, *,
                            img_w, img_elems, overlap,
                            inv_full, l1_w, gx_w, gy_w):
    """One step: an (S, L) slab of whole, row-major-flattened images."""
    c = pl.program_id(0)
    i = pl.program_id(1)
    S, L = wx_ref.shape

    @pl.when(i == 0)
    def _init():
        # Weight planes (mask * 0.05/N) computed once per core, reused each step.
        s_idx = jax.lax.broadcasted_iota(jnp.int32, (S, L), 0)
        l_idx = jax.lax.broadcasted_iota(jnp.int32, (S, L), 1)
        off = (s_idx * L + l_idx) % img_elems           # offset inside its image
        wx_ref[...] = jnp.where(off % img_w != img_w - 1,
                                jnp.float32(gx_w), jnp.float32(0.0))
        wy_ref[...] = jnp.where(off < img_elems - img_w,
                                jnp.float32(gy_w), jnp.float32(0.0))
        acc_ref[...] = jnp.zeros_like(acc_ref)

    def _compute():
        g = g_ref[...].astype(jnp.float32)
        t = t_ref[...].astype(jnp.float32)

        # MSE + 0.1*L1 with true denominators folded in (absd*(absd*a + b)).
        d = g - t
        absd = jnp.abs(d)
        contrib = absd * (absd * inv_full + l1_w)

        # --- x-gradient: neighbour at flat offset +1 (lane roll). ---
        gx = _roll_plus(g, 1, 1, L)
        tx = _roll_plus(t, 1, 1, L)
        if L % img_w != 0:
            # Lane L-1 is not always a (masked) column seam; its true neighbour
            # is the next sublane's lane 0.
            lane = jax.lax.broadcasted_iota(jnp.int32, (S, L), 1)
            last = lane == L - 1
            gx = jnp.where(last, _roll_plus(gx, 1, 0, S), gx)
            tx = jnp.where(last, _roll_plus(tx, 1, 0, S), tx)
        dgx = jnp.abs(g - gx) - jnp.abs(t - tx)
        contrib = contrib + (dgx * dgx) * wx_ref[...]

        # --- y-gradient: neighbour at flat offset +img_w. ---
        wm = img_w % L
        wd = img_w // L
        ag = _roll_plus(g, wm, 1, L)
        bt = _roll_plus(t, wm, 1, L)
        g0 = _roll_plus(ag, wd, 0, S)
        t0 = _roll_plus(bt, wd, 0, S)
        if wm:
            g1 = _roll_plus(ag, wd + 1, 0, S)
            t1 = _roll_plus(bt, wd + 1, 0, S)
            lane = jax.lax.broadcasted_iota(jnp.int32, (S, L), 1)
            carry = lane >= (L - wm)
            gy = jnp.where(carry, g1, g0)
            ty = jnp.where(carry, t1, t0)
        else:
            gy, ty = g0, t0
        dgy = jnp.abs(g - gy) - jnp.abs(t - ty)
        contrib = contrib + (dgy * dgy) * wy_ref[...]

        # Fold the block into the small accumulator with pure VPU adds.
        acc_rows = acc_ref.shape[0]
        acc_ref[...] += jnp.sum(contrib.reshape(-1, acc_rows, L), axis=0)

    if overlap:
        # Core 1's first `overlap` step(s) revisit blocks core 0 already covers:
        # skip their accumulation (costs one redundant DMA at most).
        @pl.when((c == 0) | (i >= overlap))
        def _():
            _compute()
    else:
        _compute()

    @pl.when(i == pl.num_programs(1) - 1)
    def _finalize():
        # Single cross-lane reduction, once per core.
        out_ref[...] = jnp.sum(acc_ref[...], keepdims=True).reshape(1, 1, 1)


def perceptual_loss(generated, target):
    """MSE + 0.1*L1 + 0.05*(grad_x MSE + grad_y MSE), matching the PyTorch module.

    Note: for W==1 (or H==1) the PyTorch reference takes a mean over an empty
    tensor (NaN); this kernel returns 0 for that gradient term instead.
    """
    assert generated.shape == target.shape
    assert generated.ndim == 4
    B, C, H, W = generated.shape
    BC = B * C
    N = BC * H * W
    itemsize = jnp.dtype(generated.dtype).itemsize

    # --- layout: element-order-preserving flat reshape, no pad / transpose ---
    if (H * W) % _LANE == 0:
        L = _LANE                 # lane-dense: whole images packed 128-wide
    else:
        L = W                     # fallback: one image row per slab row
    rows_per_img = (H * W) // L
    g2 = generated.reshape(BC * rows_per_img, L)
    t2 = target.reshape(BC * rows_per_img, L)

    inv_full = 1.0 / float(N)
    l1_w = 0.1 / float(N)
    gx_w = 0.05 / float(max(BC * H * (W - 1), 1))
    gy_w = 0.05 / float(max(BC * (H - 1) * W, 1))

    # --- generation-aware block sizing (v7x: 64 MiB VMEM; v5e/v6e: 128 MiB) ---
    try:
        vmem_cap = int(pltpu.get_tpu_info().vmem_capacity_bytes)
    except Exception:
        vmem_cap = 64 * 1024 * 1024
    blk_target = max(1 << 20, min(6 << 20, vmem_cap // 24))

    bytes_per_img = H * W * itemsize
    byte_cap = max(1, blk_target // bytes_per_img)
    core_cap = BC // _NCORES if BC >= _NCORES else BC

    def _best_divisor(cap):
        cap = max(1, min(int(cap), BC, 1 << 15))
        for t in range(cap, 0, -1):
            # (8,128) rule: block sublane count must be a multiple of 8, or the
            # block must span the whole leading dim.
            if BC % t == 0 and ((t * rows_per_img) % 8 == 0 or t == BC):
                return t
        return 0

    T = _best_divisor(min(byte_cap, core_cap))     # prefer >= _NCORES blocks
    if T == 0:
        T = _best_divisor(byte_cap)
    pad_imgs = 0
    if T == 0:
        # Rare ragged case: pad a few zero images (they contribute exactly 0).
        t0 = 8 // math.gcd(rows_per_img, 8)
        T = max(t0, (min(byte_cap, BC) // t0) * t0)
        pad_imgs = (-BC) % T
        pad_rows = pad_imgs * rows_per_img
        g2 = jnp.pad(g2, ((0, pad_rows), (0, 0)))
        t2 = jnp.pad(t2, ((0, pad_rows), (0, 0)))

    nblk = (BC + pad_imgs) // T
    S = T * rows_per_img
    steps = pl.cdiv(nblk, _NCORES)
    overlap = _NCORES * steps - nblk          # 0 or 1 duplicated (skipped) step
    acc_rows = 8 if S % 8 == 0 else S

    kernel = functools.partial(
        _perceptual_loss_kernel,
        img_w=W, img_elems=H * W, overlap=overlap,
        inv_full=inv_full, l1_w=l1_w, gx_w=gx_w, gy_w=gy_w)

    # Core 0 handles blocks [0, steps); core 1 handles the last `steps` blocks.
    in_idx = lambda c, i: (c * (nblk - steps) + i, 0)
    in_spec = pl.BlockSpec((S, L), in_idx)

    # Working set: 2 inputs x 2 pipeline buffers + 2 weight planes + small acc.
    usage = (4 * S * L * itemsize + 2 * S * L * 4 + acc_rows * L * 4 + (4 << 20))
    vmem_limit = int(min(int(vmem_cap * 0.8), max(32 << 20, usage + (8 << 20))))

    out = pl.pallas_call(
        kernel,
        out_shape=jax.ShapeDtypeStruct((_NCORES, 1, 1), jnp.float32),
        grid_spec=pltpu.PrefetchScalarGridSpec(
            num_scalar_prefetch=0,
            grid=(_NCORES, steps),
            in_specs=[in_spec, in_spec],
            out_specs=pl.BlockSpec((1, 1, 1), lambda c, i: (c, 0, 0)),
            scratch_shapes=[pltpu.VMEM((S, L), jnp.float32),   # wx weight plane
                            pltpu.VMEM((S, L), jnp.float32),   # wy weight plane
                            pltpu.VMEM((acc_rows, L), jnp.float32)],
        ),
        compiler_params=pltpu.CompilerParams(
            # On v7x, if a trace shows only one TC busy, switch the first axis
            # to pltpu.CORE_PARALLEL (per-core output rows are already in place).
            dimension_semantics=("parallel", "arbitrary"),
            vmem_limit_bytes=vmem_limit,
        ),
        cost_estimate=pl.CostEstimate(
            flops=34 * N,
            transcendentals=0,
            bytes_accessed=2 * N * itemsize + _NCORES * 4),
    )(g2, t2)

    # Each core's partial already includes the 1/N scalings and loss weights.
    return jnp.sum(out)


def perceptual_loss_ref(generated, target):
    """Pure-JAX reference mirroring the PyTorch module exactly."""
    mse = jnp.mean((generated - target) ** 2)
    l1 = jnp.mean(jnp.abs(generated - target))
    gx_g = jnp.abs(generated[:, :, :, :-1] - generated[:, :, :, 1:])
    gy_g = jnp.abs(generated[:, :, :-1, :] - generated[:, :, 1:, :])
    gx_t = jnp.abs(target[:, :, :, :-1] - target[:, :, :, 1:])
    gy_t = jnp.abs(target[:, :, :-1, :] - target[:, :, 1:, :])
    grad = jnp.mean((gx_g - gx_t) ** 2) + jnp.mean((gy_g - gy_t) ** 2)
    return mse + 0.1 * l1 + 0.05 * grad


if __name__ == "__main__":
    key = jax.random.PRNGKey(0)

    def _check(shape, salt):
        kg, kt = jax.random.split(jax.random.fold_in(key, salt))
        g = jax.random.normal(kg, shape, dtype=jnp.float32)
        t = jax.random.normal(kt, shape, dtype=jnp.float32)
        got = jax.block_until_ready(perceptual_loss(g, t))
        ref = jax.block_until_ready(perceptual_loss_ref(g, t))
        assert jnp.allclose(got, ref, rtol=1e-5, atol=1e-5), (shape, got, ref)

    _check((2, 4, 16, 16), 0)   # lane-dense path: 128 | H*W, W | 128
    _check((2, 3, 16, 20), 1)   # fallback path:   H*W not a multiple of 128
    _check((1, 2, 32, 48), 2)   # lane-dense path with W not dividing 128 + tail skip
    print("KERNEL_OK")
</pallas_src>

<mosaic_0001>
module attributes {stable_mosaic.version = 11 : i64} {
  func.func @_perceptual_loss_kernel(%arg0: i32, %arg1: i32, %arg2: memref<8x128xf32, #tpu.memory_space<vmem>>, %arg3: memref<8x128xf32, #tpu.memory_space<vmem>>, %arg4: memref<1x1x1xf32, #tpu.memory_space<vmem>>, %arg5: memref<8x128xf32, #tpu.memory_space<vmem>>, %arg6: memref<8x128xf32, #tpu.memory_space<vmem>>, %arg7: memref<8x128xf32, #tpu.memory_space<vmem>>) attributes {dimension_semantics = [#tpu.dimension_semantics<parallel>, #tpu.dimension_semantics<arbitrary>], iteration_bounds = array<i64: 2, 1>, scalar_prefetch = 0 : i64, scratch_operands = 3 : i64, tpu.core_type = #tpu.core_type<tc>, window_params = [{transform_indices = @transform_0, window_bounds = array<i64: 8, 128>}, {transform_indices = @transform_1, window_bounds = array<i64: 8, 128>}, {transform_indices = @transform_2, window_bounds = array<i64: 1, 1, 1>}]} {
    %c0_i32 = arith.constant 0 : i32
    %0 = arith.cmpi eq, %arg1, %c0_i32 : i32
    %1 = arith.extui %0 : i1 to i32
    %c0_i32_0 = arith.constant 0 : i32
    %2 = arith.cmpi ne, %1, %c0_i32_0 : i32
    scf.if %2 {
      %49 = tpu.iota {dimensions = array<i32: 0>} : vector<8x128xi32>
      %50 = tpu.iota {dimensions = array<i32: 1>} : vector<8x128xi32>
      %c128_i32 = arith.constant 128 : i32
      %51 = vector.broadcast %c128_i32 : i32 to vector<8x128xi32>
      %52 = arith.muli %49, %51 : vector<8x128xi32>
      %53 = arith.addi %52, %50 : vector<8x128xi32>
      %c256_i32 = arith.constant 256 : i32
      %c0_i32_20 = arith.constant 0 : i32
      %54 = arith.cmpi eq, %c256_i32, %c0_i32_20 : i32
      %c1_i32 = arith.constant 1 : i32
      %55 = arith.select %54, %c1_i32, %c256_i32 : i32
      %56 = vector.broadcast %55 : i32 to vector<8x128xi32>
      %57 = arith.remsi %53, %56 : vector<8x128xi32>
      %c0_i32_21 = arith.constant 0 : i32
      %58 = vector.broadcast %c0_i32_21 : i32 to vector<8x128xi32>
      %59 = arith.cmpi ne, %57, %58 : vector<8x128xi32>
      %c0_i32_22 = arith.constant 0 : i32
      %60 = vector.broadcast %c0_i32_22 : i32 to vector<8x128xi32>
      %61 = arith.cmpi slt, %57, %60 : vector<8x128xi32>
      %c0_i32_23 = arith.constant 0 : i32
      %62 = arith.cmpi slt, %55, %c0_i32_23 : i32
      %63 = vector.broadcast %62 : i1 to vector<8x128xi1>
      %64 = vector.broadcast %63 : vector<8x128xi1> to vector<8x128xi1>
      %65 = arith.xori %61, %64 : vector<8x128xi1>
      %66 = arith.andi %65, %59 : vector<8x128xi1>
      %67 = vector.broadcast %55 : i32 to vector<8x128xi32>
      %68 = arith.addi %57, %67 : vector<8x128xi32>
      %69 = arith.select %66, %68, %57 : vector<8x128xi1>, vector<8x128xi32>
      %c16_i32 = arith.constant 16 : i32
      %c0_i32_24 = arith.constant 0 : i32
      %70 = arith.cmpi eq, %c16_i32, %c0_i32_24 : i32
      %c1_i32_25 = arith.constant 1 : i32
      %71 = arith.select %70, %c1_i32_25, %c16_i32 : i32
      %72 = vector.broadcast %71 : i32 to vector<8x128xi32>
      %73 = arith.remsi %69, %72 : vector<8x128xi32>
      %c0_i32_26 = arith.constant 0 : i32
      %74 = vector.broadcast %c0_i32_26 : i32 to vector<8x128xi32>
      %75 = arith.cmpi ne, %73, %74 : vector<8x128xi32>
      %c0_i32_27 = arith.constant 0 : i32
      %76 = vector.broadcast %c0_i32_27 : i32 to vector<8x128xi32>
      %77 = arith.cmpi slt, %73, %76 : vector<8x128xi32>
      %c0_i32_28 = arith.constant 0 : i32
      %78 = arith.cmpi slt, %71, %c0_i32_28 : i32
      %79 = vector.broadcast %78 : i1 to vector<8x128xi1>
      %80 = vector.broadcast %79 : vector<8x128xi1> to vector<8x128xi1>
      %81 = arith.xori %77, %80 : vector<8x128xi1>
      %82 = arith.andi %81, %75 : vector<8x128xi1>
      %83 = vector.broadcast %71 : i32 to vector<8x128xi32>
      %84 = arith.addi %73, %83 : vector<8x128xi32>
      %85 = arith.select %82, %84, %73 : vector<8x128xi1>, vector<8x128xi32>
      %c15_i32 = arith.constant 15 : i32
      %86 = vector.broadcast %c15_i32 : i32 to vector<8x128xi32>
      %87 = arith.cmpi ne, %85, %86 : vector<8x128xi32>
      %cst_29 = arith.constant 2.60416673E-5 : f32
      %cst_30 = arith.constant 0.000000e+00 : f32
      %88 = vector.broadcast %cst_29 : f32 to vector<8x128xf32>
      %89 = vector.broadcast %cst_30 : f32 to vector<8x128xf32>
      %90 = arith.select %87, %88, %89 : vector<8x128xi1>, vector<8x128xf32>
      %c0_31 = arith.constant 0 : index
      %c0_32 = arith.constant 0 : index
      %91 = vector.load %arg5[%c0_31, %c0_32] : memref<8x128xf32, #tpu.memory_space<vmem>>, vector<8x128xf32>
      tpu.vector_store %arg5[%c0_31, %c0_32], %90 {strides = array<i32>} : memref<8x128xf32, #tpu.memory_space<vmem>>, vector<8x128xf32>,
      %c240_i32 = arith.constant 240 : i32
      %92 = vector.broadcast %c240_i32 : i32 to vector<8x128xi32>
      %93 = arith.cmpi slt, %69, %92 : vector<8x128xi32>
      %cst_33 = arith.constant 2.60416673E-5 : f32
      %cst_34 = arith.constant 0.000000e+00 : f32
      %94 = vector.broadcast %cst_33 : f32 to vector<8x128xf32>
      %95 = vector.broadcast %cst_34 : f32 to vector<8x128xf32>
      %96 = arith.select %93, %94, %95 : vector<8x128xi1>, vector<8x128xf32>
      %c0_35 = arith.constant 0 : index
      %c0_36 = arith.constant 0 : index
      %97 = vector.load %arg6[%c0_35, %c0_36] : memref<8x128xf32, #tpu.memory_space<vmem>>, vector<8x128xf32>
      tpu.vector_store %arg6[%c0_35, %c0_36], %96 {strides = array<i32>} : memref<8x128xf32, #tpu.memory_space<vmem>>, vector<8x128xf32>,
      %cst_37 = arith.constant 0.000000e+00 : f32
      %98 = vector.broadcast %cst_37 : f32 to vector<8x128xf32>
      %c0_38 = arith.constant 0 : index
      %c0_39 = arith.constant 0 : index
      %99 = vector.load %arg7[%c0_38, %c0_39] : memref<8x128xf32, #tpu.memory_space<vmem>>, vector<8x128xf32>
      tpu.vector_store %arg7[%c0_38, %c0_39], %98 {strides = array<i32>} : memref<8x128xf32, #tpu.memory_space<vmem>>, vector<8x128xf32>,
    } else {
    }
    %c0 = arith.constant 0 : index
    %c0_1 = arith.constant 0 : index
    %3 = vector.load %arg2[%c0, %c0_1] : memref<8x128xf32, #tpu.memory_space<vmem>>, vector<8x128xf32>
    %c0_2 = arith.constant 0 : index
    %c0_3 = arith.constant 0 : index
    %4 = vector.load %arg3[%c0_2, %c0_3] : memref<8x128xf32, #tpu.memory_space<vmem>>, vector<8x128xf32>
    %5 = arith.subf %3, %4 : vector<8x128xf32>
    %6 = math.absf %5 : vector<8x128xf32>
    %cst = arith.constant 4.8828125E-4 : f32
    %7 = vector.broadcast %cst : f32 to vector<8x128xf32>
    %8 = arith.mulf %6, %7 : vector<8x128xf32>
    %cst_4 = arith.constant 4.88281257E-5 : f32
    %9 = vector.broadcast %cst_4 : f32 to vector<8x128xf32>
    %10 = arith.addf %8, %9 : vector<8x128xf32>
    %11 = arith.mulf %6, %10 : vector<8x128xf32>
    %c127_i32 = arith.constant 127 : i32
    %12 = tpu.dynamic_rotate %3 by %c127_i32 dim 1 : vector<8x128xf32>, i32 -> vector<8x128xf32>
    %c127_i32_5 = arith.constant 127 : i32
    %13 = tpu.dynamic_rotate %4 by %c127_i32_5 dim 1 : vector<8x128xf32>, i32 -> vector<8x128xf32>
    %14 = arith.subf %3, %12 : vector<8x128xf32>
    %15 = math.absf %14 : vector<8x128xf32>
    %16 = arith.subf %4, %13 : vector<8x128xf32>
    %17 = math.absf %16 : vector<8x128xf32>
    %18 = arith.subf %15, %17 : vector<8x128xf32>
    %19 = arith.mulf %18, %18 : vector<8x128xf32>
    %c0_6 = arith.constant 0 : index
    %c0_7 = arith.constant 0 : index
    %20 = vector.load %arg5[%c0_6, %c0_7] : memref<8x128xf32, #tpu.memory_space<vmem>>, vector<8x128xf32>
    %21 = arith.mulf %19, %20 : vector<8x128xf32>
    %22 = arith.addf %11, %21 : vector<8x128xf32>
    %c112_i32 = arith.constant 112 : i32
    %23 = tpu.dynamic_rotate %3 by %c112_i32 dim 1 : vector<8x128xf32>, i32 -> vector<8x128xf32>
    %c112_i32_8 = arith.constant 112 : i32
    %24 = tpu.dynamic_rotate %4 by %c112_i32_8 dim 1 : vector<8x128xf32>, i32 -> vector<8x128xf32>
    %c7_i32 = arith.constant 7 : i32
    %25 = tpu.dynamic_rotate %23 by %c7_i32 dim 0 : vector<8x128xf32>, i32 -> vector<8x128xf32>
    %c7_i32_9 = arith.constant 7 : i32
    %26 = tpu.dynamic_rotate %24 by %c7_i32_9 dim 0 : vector<8x128xf32>, i32 -> vector<8x128xf32>
    %27 = tpu.iota {dimensions = array<i32: 1>} : vector<8x128xi32>
    %c112_i32_10 = arith.constant 112 : i32
    %28 = vector.broadcast %c112_i32_10 : i32 to vector<8x128xi32>
    %29 = arith.cmpi sge, %27, %28 : vector<8x128xi32>
    %30 = arith.select %29, %25, %23 : vector<8x128xi1>, vector<8x128xf32>
    %31 = arith.select %29, %26, %24 : vector<8x128xi1>, vector<8x128xf32>
    %32 = arith.subf %3, %30 : vector<8x128xf32>
    %33 = math.absf %32 : vector<8x128xf32>
    %34 = arith.subf %4, %31 : vector<8x128xf32>
    %35 = math.absf %34 : vector<8x128xf32>
    %36 = arith.subf %33, %35 : vector<8x128xf32>
    %37 = arith.mulf %36, %36 : vector<8x128xf32>
    %c0_11 = arith.constant 0 : index
    %c0_12 = arith.constant 0 : index
    %38 = vector.load %arg6[%c0_11, %c0_12] : memref<8x128xf32, #tpu.memory_space<vmem>>, vector<8x128xf32>
    %39 = arith.mulf %37, %38 : vector<8x128xf32>
    %40 = arith.addf %22, %39 : vector<8x128xf32>
    %c0_13 = arith.constant 0 : index
    %c0_14 = arith.constant 0 : index
    %41 = vector.load %arg7[%c0_13, %c0_14] : memref<8x128xf32, #tpu.memory_space<vmem>>, vector<8x128xf32>
    %42 = vector.shape_cast %40 : vector<8x128xf32> to vector<1x8x128xf32>
    %cst_15 = arith.constant dense<0.000000e+00> : vector<8x128xf32>
    %43 = vector.multi_reduction <add>, %42, %cst_15 [0] : vector<1x8x128xf32> to vector<8x128xf32>
    %44 = arith.addf %41, %43 : vector<8x128xf32>
    %c0_16 = arith.constant 0 : index
    %c0_17 = arith.constant 0 : index
    %45 = vector.load %arg7[%c0_16, %c0_17] : memref<8x128xf32, #tpu.memory_space<vmem>>, vector<8x128xf32>
    tpu.vector_store %arg7[%c0_16, %c0_17], %44 {strides = array<i32>} : memref<8x128xf32, #tpu.memory_space<vmem>>, vector<8x128xf32>,
    %c0_i32_18 = arith.constant 0 : i32
    %46 = arith.cmpi eq, %arg1, %c0_i32_18 : i32
    %47 = arith.extui %46 : i1 to i32
    %c0_i32_19 = arith.constant 0 : i32
    %48 = arith.cmpi ne, %47, %c0_i32_19 : i32
    scf.if %48 {
      %c0_20 = arith.constant 0 : index
      %c0_21 = arith.constant 0 : index
      %49 = vector.load %arg7[%c0_20, %c0_21] : memref<8x128xf32, #tpu.memory_space<vmem>>, vector<8x128xf32>
      %50 = vector.shape_cast %49 : vector<8x128xf32> to vector<1x8x128xf32>
      %cst_22 = arith.constant dense<0.000000e+00> : vector<1xf32>
      %51 = vector.multi_reduction <add>, %50, %cst_22 [1, 2] : vector<1x8x128xf32> to vector<1xf32>
      %52 = vector.shape_cast %51 : vector<1xf32> to vector<1x1x1xf32>
      %53 = vector.extract %52[0, 0, 0] : f32 from vector<1x1x1xf32>
      %54 = vector.broadcast %53 : f32 to vector<1x1xf32>
      %55 = vector.shape_cast %54 : vector<1x1xf32> to vector<1x1x1xf32>
      %c0_23 = arith.constant 0 : index
      %c0_24 = arith.constant 0 : index
      %c0_25 = arith.constant 0 : index
      %56 = vector.load %arg4[%c0_23, %c0_24, %c0_25] : memref<1x1x1xf32, #tpu.memory_space<vmem>>, vector<1x1x1xf32>
      tpu.vector_store %arg4[%c0_23, %c0_24, %c0_25], %55 {strides = array<i32>} : memref<1x1x1xf32, #tpu.memory_space<vmem>>, vector<1x1x1xf32>,
    } else {
    }
    return
  }
  func.func @transform_0(%arg0: i32, %arg1: i32) -> (i32, i32) {
    %c1_i32 = arith.constant 1 : i32
    %0 = arith.muli %arg0, %c1_i32 : i32
    %1 = arith.addi %0, %arg1 : i32
    %c0_i32 = arith.constant 0 : i32
    %c0_i32_0 = arith.constant 0 : i32
    return %1, %c0_i32 : i32, i32
  }
  func.func @transform_1(%arg0: i32, %arg1: i32) -> (i32, i32) {
    %c1_i32 = arith.constant 1 : i32
    %0 = arith.muli %arg0, %c1_i32 : i32
    %1 = arith.addi %0, %arg1 : i32
    %c0_i32 = arith.constant 0 : i32
    %c0_i32_0 = arith.constant 0 : i32
    return %1, %c0_i32 : i32, i32
  }
  func.func @transform_2(%arg0: i32, %arg1: i32) -> (i32, i32, i32) {
    %c0_i32 = arith.constant 0 : i32
    %c0_i32_0 = arith.constant 0 : i32
    %c0_i32_1 = arith.constant 0 : i32
    return %arg0, %c0_i32, %c0_i32_0 : i32, i32, i32
  }
}

</mosaic_0001>

<llo_original>
// kernel: tpu_custom_call.1
$region0: #{tpu_custom_call.1}
  #allocation0 [shape = 'u32[]', space=smem, size = 0x4, offset = 0x4, fixed_abs, tag = 'smem constant byte address 0x4 - core index']
  #allocation1 [shape = 'u32[72,128]{1,0:T(1,128)}', space=vmem, size = 0x9000, scoped, tag = 'internal scratch']
  #allocation2 [shape = 'f32[8,128]{1,0:T(8,128)}', space=vmem, size = 0x1000, scoped, tag = 'scratch operand']
  #allocation3 [shape = 'f32[8,128]{1,0:T(8,128)}', space=vmem, size = 0x1000, scoped, tag = 'scratch operand']
  #allocation4 [shape = 'f32[8,128]{1,0:T(8,128)}', space=vmem, size = 0x1000, scoped, tag = 'scratch operand']
  %s0 = inlined_call_operand.hbm [shape: f32[16,128], index: 0, kind: input, shape index: {}]
  %s1 = inlined_call_operand.hbm [shape: f32[16,128], index: 1, kind: input, shape index: {}]
  %s2 = inlined_call_operand.vmem [shape: f32[2,1,1], index: 2, kind: output, shape index: {}]
  %s3 = sld [smem:[#allocation0]]
  $region57: #{tpu_custom_call.1} parent=0
    _
  %s5 = ssub.s32 1, %s3
  %s6 = scalar_select 0, %s5, %s3
  $region1: #{tpu_custom_call.1} parent=0
    #allocation5 [shape = 'u8[8192]{0}', space=vmem, size = 0x2000, scoped, tag = 'input window, operand 0']
    #allocation6 [shape = 's32[2]{0}', space=sflag, size = 0x8, scoped, tag = 'scoped memory for tpu_custom_call.1']
    #allocation7 [shape = 'u8[8192]{0}', space=vmem, size = 0x2000, scoped, tag = 'input window, operand 1']
    #allocation8 [shape = 's32[2]{0}', space=sflag, size = 0x8, scoped, tag = 'scoped memory for tpu_custom_call.1']
    %7 = vsyncpa [#allocation6], 0
    %s8 = scalar_lea.sflag [#allocation6], 1
    %9 = vsyncpa %s8, 0
    %10 = vsyncpa [#allocation8], 0
    %s11 = scalar_lea.sflag [#allocation8], 1
    %12 = vsyncpa %s11, 0
    loop: start=0, step=1, limit=4
    $region2: #{tpu_custom_call.1} parent=1 // loop_pre_header
      _
    $region3: #{tpu_custom_call.1} parent=1 // loop_header
      %s14 = sphi 0, %s18
      %p15 = scmp.ge.s32.totalorder %s14, 4
      %s21 = sphi 0, %s33
      %s22 = sphi 0, %s29
      %s23 = sphi 0, %s21
      %s24 = sphi 0, %s22
      %s25 = sphi 0, %s23
      %s26 = sphi 0, %s24
      %s38 = sphi 0, %s40
      %s41 = sphi 0, %s38
      %s42 = sphi 0, %s41
      %s58 = sphi 0, %s42
      %s66 = sphi 0, %s68
      %s69 = sphi 0, %s66
      %s70 = sphi 0, %s69
      %s86 = sphi 0, %s70
      %s92 = sphi 0, %s94
      %s95 = sphi 0, %s92
      %s96 = sphi 0, %s95
      %s112 = sphi 0, %s96
    $region4: #{tpu_custom_call.1} parent=1 // loop_header_branch
      %17 = sbr.rel (%p15) target = $region8
    $region5: #{tpu_custom_call.1} parent=1 // loop_body
      %s19 = ssub.s32 %s14, 1
      %s20 = ssub.s32 %s14, 2
      %s27 = sadd.s32 1, %s22
      %p28 = scmp.ge.s32.totalorder %s27, 1
      %s29 = scalar_select %p28, 0, %s27
      %s30 = sadd.s32 1, %s21
      %s31 = scalar_select %p28, %s30, %s21
      %p32 = scmp.ge.s32.totalorder %s31, 2
      %s33 = scalar_select %p32, 0, %s31
      %s34 = sadd.s32 %s21, %s22
      %s35 = sadd.s32 %s33, %s29
      %s36 = ssub.s32 %s34, %s35
      %p37 = scmp.eq.s32.totalorder %s36, 0
      %s39 = sadd.s32 %s38, 1
      %s40 = scalar_select %p37, %s38, %s39
      %p43 = pneg %p37
      %p44 = scmp.eq.s32.totalorder %s14, 1
      %p45 = por %p43, %p44
      %p46 = scmp.ne.s32.totalorder %s38, %s41
      %p47 = scmp.eq.s32.totalorder %s14, 0
      %p48 = por %p46, %p47
      %p49 = scmp.ne.s32.totalorder %s38, %s41
      %p50 = scmp.eq.s32.totalorder %s19, 1
      %p51 = por %p49, %p50
      %p52 = scmp.ne.s32.totalorder %s41, %s42
      %p53 = scmp.eq.s32.totalorder %s19, 0
      %p54 = por %p52, %p53
      %p55 = scmp.ne.s32.totalorder %s41, %s42
      %p56 = scmp.eq.s32.totalorder %s20, 1
      %p57 = por %p55, %p56
      %p59 = scmp.ne.s32.totalorder %s42, %s58
      %p60 = scmp.eq.s32.totalorder %s20, 0
      %p61 = por %p59, %p60
      %s62 = sadd.s32 %s21, %s22
      %s63 = sadd.s32 %s33, %s29
      %s64 = ssub.s32 %s62, %s63
      %p65 = scmp.eq.s32.totalorder %s64, 0
      %s67 = sadd.s32 %s66, 1
      %s68 = scalar_select %p65, %s66, %s67
      %p71 = pneg %p65
      %p72 = scmp.eq.s32.totalorder %s14, 1
      %p73 = por %p71, %p72
      %p74 = scmp.ne.s32.totalorder %s66, %s69
      %p75 = scmp.eq.s32.totalorder %s14, 0
      %p76 = por %p74, %p75
      %p77 = scmp.ne.s32.totalorder %s66, %s69
      %p78 = scmp.eq.s32.totalorder %s19, 1
      %p79 = por %p77, %p78
      %p80 = scmp.ne.s32.totalorder %s69, %s70
      %p81 = scmp.eq.s32.totalorder %s19, 0
      %p82 = por %p80, %p81
      %p83 = scmp.ne.s32.totalorder %s69, %s70
      %p84 = scmp.eq.s32.totalorder %s20, 1
      %p85 = por %p83, %p84
      %p87 = scmp.ne.s32.totalorder %s70, %s86
      %p88 = scmp.eq.s32.totalorder %s20, 0
      %p89 = por %p87, %p88
      %s90 = ssub.s32 %s21, %s33
      %p91 = scmp.eq.s32.totalorder %s90, 0
      %s93 = sadd.s32 %s92, 1
      %s94 = scalar_select %p91, %s92, %s93
      %p97 = pneg %p91
      %p98 = scmp.eq.s32.totalorder %s14, 1
      %p99 = por %p97, %p98
      %p100 = scmp.ne.s32.totalorder %s92, %s95
      %p101 = scmp.eq.s32.totalorder %s14, 0
      %p102 = por %p100, %p101
      %p103 = scmp.ne.s32.totalorder %s92, %s95
      %p104 = scmp.eq.s32.totalorder %s19, 1
      %p105 = por %p103, %p104
      %p106 = scmp.ne.s32.totalorder %s95, %s96
      %p107 = scmp.eq.s32.totalorder %s19, 0
      %p108 = por %p106, %p107
      %p109 = scmp.ne.s32.totalorder %s95, %s96
      %p110 = scmp.eq.s32.totalorder %s20, 1
      %p111 = por %p109, %p110
      %p113 = scmp.ne.s32.totalorder %s96, %s112
      %p114 = scmp.eq.s32.totalorder %s20, 0
      %p115 = por %p113, %p114
      %p116 = scmp.le.s32.totalorder 1, %s14
      %p117 = scmp.lt.s32.totalorder %s14, 3
      %p118 = pnand %p116, %p117
      %p119 = pneg %p118
      // Predicated region
      $region9: #{tpu_custom_call.1} parent=5 // pred_check
        _
      $region10: #{tpu_custom_call.1} parent=5 // pred_check_branch
        %121 = sbr.rel (%p118) target = $region12
      $region11: #{tpu_custom_call.1} parent=5 // pred_region
        %s122 = ssub.s32 %s14, 1
      $region12: #{tpu_custom_call.1} parent=5 // pred_fallthru
        _
      %p123 = scmp.lt.s32.totalorder %s14, 2
      // Predicated region
      $region13: #{tpu_custom_call.1} parent=5 // pred_check
        %p124 = pneg %p123
      $region14: #{tpu_custom_call.1} parent=5 // pred_check_branch
        %126 = sbr.rel (%p124) target = $region16
      $region15: #{tpu_custom_call.1} parent=5 // pred_region
        // Predicated region
        $region17: #{tpu_custom_call.1} parent=15 // pred_check
          %p127 = pneg %p48
        $region18: #{tpu_custom_call.1} parent=15 // pred_check_branch
          %129 = sbr.rel (%p127) target = $region20
        $region19: #{tpu_custom_call.1} parent=15 // pred_region
          %s130 = sand.u32 %s38, 1
          %s131 = scalar_lea.sflag [#allocation6], %s130
          %s132 = sand.u32 %s38, 1
          %s133 = smul.addr %s132, 8
          %s134 = scalar_lea.vmem [#allocation5], %s133
          %s135 = sadd.s32 %s21, %s22
          %137 = vsyncadd %s131, 0
          %s138 = smul.addr %s135, 8
          %s139 = scalar_lea.hbm %s0, %s138
          %s141 = sshll.u32 %s139, 4
          %s142 = int_to_ptr.hbm [resolvable:$true] %s141
          %s143 = sshll.u32 %s134, 4
          %s144 = int_to_ptr.vmem [resolvable:$true] %s143
          %146 = dma.hbm_to_vmem [thread:$0]  %s142, 128, %s144, %s131
        $region20: #{tpu_custom_call.1} parent=15 // pred_fallthru
          _
        // Predicated region
        $region21: #{tpu_custom_call.1} parent=15 // pred_check
          %p147 = pneg %p76
        $region22: #{tpu_custom_call.1} parent=15 // pred_check_branch
          %149 = sbr.rel (%p147) target = $region24
        $region23: #{tpu_custom_call.1} parent=15 // pred_region
          %s150 = sand.u32 %s66, 1
          %s151 = scalar_lea.sflag [#allocation8], %s150
          %s152 = sand.u32 %s66, 1
          %s153 = smul.addr %s152, 8
          %s154 = scalar_lea.vmem [#allocation7], %s153
          %s155 = sadd.s32 %s21, %s22
          %157 = vsyncadd %s151, 0
          %s158 = smul.addr %s155, 8
          %s159 = scalar_lea.hbm %s1, %s158
          %s161 = sshll.u32 %s159, 4
          %s162 = int_to_ptr.hbm [resolvable:$true] %s161
          %s163 = sshll.u32 %s154, 4
          %s164 = int_to_ptr.vmem [resolvable:$true] %s163
          %166 = dma.hbm_to_vmem [thread:$0]  %s162, 128, %s164, %s151
        $region24: #{tpu_custom_call.1} parent=15 // pred_fallthru
          _
      $region16: #{tpu_custom_call.1} parent=5 // pred_fallthru
        _
      %p167 = scmp.le.s32.totalorder 1, %s14
      %p168 = scmp.lt.s32.totalorder %s14, 3
      %p169 = pnand %p167, %p168
      %p170 = pneg %p169
      // Predicated region
      $region25: #{tpu_custom_call.1} parent=5 // pred_check
        _
      $region26: #{tpu_custom_call.1} parent=5 // pred_check_branch
        %172 = sbr.rel (%p169) target = $region28
      $region27: #{tpu_custom_call.1} parent=5 // pred_region
        %s173 = ssub.s32 %s14, 1
        %s174 = sand.u32 %s41, 1
        %s175 = scalar_lea.sflag [#allocation6], %s174
        %s176 = sand.u32 %s41, 1
        %s177 = smul.addr %s176, 8
        %s178 = scalar_lea.vmem [#allocation5], %s177
        // Predicated region
        $region29: #{tpu_custom_call.1} parent=27 // pred_check
          %p179 = pneg %p54
        $region30: #{tpu_custom_call.1} parent=27 // pred_check_branch
          %181 = sbr.rel (%p179) target = $region32
        $region31: #{tpu_custom_call.1} parent=27 // pred_region
          %183 = dma.done %s175, 128
        $region32: #{tpu_custom_call.1} parent=27 // pred_fallthru
          _
        %s184 = sand.u32 %s69, 1
        %s185 = scalar_lea.sflag [#allocation8], %s184
        %s186 = sand.u32 %s69, 1
        %s187 = smul.addr %s186, 8
        %s188 = scalar_lea.vmem [#allocation7], %s187
        // Predicated region
        $region33: #{tpu_custom_call.1} parent=27 // pred_check
          %p189 = pneg %p82
        $region34: #{tpu_custom_call.1} parent=27 // pred_check_branch
          %191 = sbr.rel (%p189) target = $region36
        $region35: #{tpu_custom_call.1} parent=27 // pred_region
          %193 = dma.done %s185, 128
        $region36: #{tpu_custom_call.1} parent=27 // pred_fallthru
          _
        %s194 = sand.u32 %s41, 1
        %s195 = scalar_lea.sflag [#allocation6], %s194
        %s196 = sand.u32 %s41, 1
        %s197 = smul.addr %s196, 8
        %s198 = scalar_lea.vmem [#allocation5], %s197
        %p199 = pneg %p54
        %p200 = pneg %p51
        %s201 = sand.u32 %s69, 1
        %s202 = scalar_lea.sflag [#allocation8], %s201
        %s203 = sand.u32 %s69, 1
        %s204 = smul.addr %s203, 8
        %s205 = scalar_lea.vmem [#allocation7], %s204
        %p206 = pneg %p82
        %p207 = pneg %p79
        %p208 = pneg %p108
        %p209 = pneg %p105
        %p210 = scmp.lt.s32.totalorder %s23, 1
        %s211 = scalar_select %p210, %s23, 1
        %s212 = scalar_lea.vmem %s2, %s211
        %s213 = sadd.s32 %s23, %s24
        %s214 = sadd.s32 %s23, %s24
        %p215 = scmp.lt.s32.totalorder %s23, 1
        %s216 = scalar_select %p215, %s23, 1
        %s217 = scalar_lea.vmem %s2, %s216
        %p218 = scmp.eq.s32.totalorder %s24, 0
        // Predicated region
        $region37: #{tpu_custom_call.1} parent=27 // pred_check
          %p219 = pneg %p218
        $region38: #{tpu_custom_call.1} parent=27 // pred_check_branch
          %221 = sbr.rel (%p219) target = $region40
        $region39: #{tpu_custom_call.1} parent=27 // pred_region
          %v222 = vlaneseq
          %v223 = vshrl.u32 %v222, 7
          %v224 = vlaneseq
          %v225 = vand.u32 %v224, 127
          %v226 = vmul.u32 %v223, 128
          %v227 = vadd.s32 %v226, %v225
          %vm228 = vcmp.lt.s32.totalorder %v227, 0
          %v229 = vsub.s32 0, %v227
          %v230 = vsel %vm228, %v229, %v227
          %v231 = vshrl.u32 %v230, 8
          %v232 = vand.u32 %v230, 255
          %v233 = vsub.s32 0, %v232
          %v234 = vsel %vm228, %v233, %v232
          %vm235 = vcmp.ne.s32.totalorder %v234, 0
          %vm236 = vcmp.lt.s32.totalorder %v234, 0
          %vm237 = vmand %vm236, %vm235
          %v238 = vadd.s32 %v234, 256
          %v239 = vsel %vm237, %v238, %v234
          %vm240 = vcmp.lt.s32.totalorder %v239, 0
          %v241 = vsub.s32 0, %v239
          %v242 = vsel %vm240, %v241, %v239
          %v243 = vshrl.u32 %v242, 4
          %v244 = vand.u32 %v242, 15
          %v245 = vsub.s32 0, %v244
          %v246 = vsel %vm240, %v245, %v244
          %vm247 = vcmp.ne.s32.totalorder %v246, 0
          %vm248 = vcmp.lt.s32.totalorder %v246, 0
          %vm249 = vmand %vm248, %vm247
          %v250 = vadd.s32 %v246, 16
          %v251 = vsel %vm249, %v250, %v246
          %vm252 = vcmp.ne.s32.totalorder %v251, 15
          %v253 = vsel %vm252, 2.6041667e-05, 0.0
          %254 = vst [vmem:[#allocation2] sm:$0xff] %v253
          %vm255 = vcmp.lt.s32.totalorder %v239, 240
          %v256 = vsel %vm255, 2.6041667e-05, 0.0
          %257 = vst [vmem:[#allocation3] sm:$0xff] %v256
          %258 = vst [vmem:[#allocation4] sm:$0xff] 0.0
        $region40: #{tpu_custom_call.1} parent=27 // pred_fallthru
          _
        %v259 = vld [vmem:[%s178] sm:$0xff]
        %v260 = vld [vmem:[%s188] sm:$0xff]
        %v261 = vsub.f32 %v259, %v260
        %v262 = vand.u32 2147483647, %v261
        %v263 = vmul.f32 %v262, 0.00048828125
        %v264 = vadd.f32 %v263, 4.8828126e-05
        %v265 = vmul.f32 %v262, %v264
        %266 = vrot.lane.b32.xlu0 %v259, 127
        %v267 = vpop.permute.xlu0 %266
        %268 = vrot.lane.b32.xlu0 %v260, 127
        %v269 = vpop.permute.xlu0 %268
        %v270 = vsub.f32 %v259, %v267
        %v271 = vand.u32 2147483647, %v270
        %v272 = vsub.f32 %v260, %v269
        %v273 = vand.u32 2147483647, %v272
        %v274 = vsub.f32 %v271, %v273
        %v275 = vmul.f32 %v274, %v274
        %v276 = vld [vmem:[#allocation2] sm:$0xff]
        %v277 = vmul.f32 %v275, %v276
        %v278 = vadd.f32 %v265, %v277
        %279 = vrot.lane.b32.xlu0 %v259, 112
        %v280 = vpop.permute.xlu0 %279
        %281 = vrot.lane.b32.xlu0 %v260, 112
        %v282 = vpop.permute.xlu0 %281
        %v283 = vrot.slane %v280, 1
        %v284 = vrot.slane %v282, 1
        %v285 = vlaneseq
        %v286 = vand.u32 %v285, 127
        %vm287 = vcmp.ge.s32.totalorder %v286, 112
        %v288 = vsel %vm287, %v283, %v280
        %v289 = vsel %vm287, %v284, %v282
        %v290 = vsub.f32 %v259, %v288
        %v291 = vand.u32 2147483647, %v290
        %v292 = vsub.f32 %v260, %v289
        %v293 = vand.u32 2147483647, %v292
        %v294 = vsub.f32 %v291, %v293
        %v295 = vmul.f32 %v294, %v294
        %v296 = vld [vmem:[#allocation3] sm:$0xff]
        %v297 = vmul.f32 %v295, %v296
        %v298 = vadd.f32 %v278, %v297
        %v299 = vld [vmem:[#allocation4] sm:$0xff]
        %v300 = vadd.f32 %v298, 0.0
        %v301 = vadd.f32 %v299, %v300
        %302 = vst [vmem:[#allocation4] sm:$0xff] %v301
        // Predicated region
        $region41: #{tpu_custom_call.1} parent=27 // pred_check
          %p303 = pneg %p218
        $region42: #{tpu_custom_call.1} parent=27 // pred_check_branch
          %305 = sbr.rel (%p303) target = $region44
        $region43: #{tpu_custom_call.1} parent=27 // pred_region
          %v306 = vld [vmem:[#allocation4] sm:$0xff]
          %307 = vadd.xlane.f32.xlu0 %v306
          %v308 = vpop.xlane.xlu0 %307
          %v309 = vrot.slane %v308, 4
          %v310 = vadd.f32 %v308, %v309
          %v311 = vrot.slane %v310, 2
          %v312 = vadd.f32 %v310, %v311
          %v313 = vrot.slane %v312, 1
          %v314 = vadd.f32 %v312, %v313
          %s315 = vtos %v314
          %v316 = vstv %s315
          %vm317 = vcmask 0
          %318 = vst.msk [vmem:[%s217] sm:$0x1] %vm317, %v316
        $region44: #{tpu_custom_call.1} parent=27 // pred_fallthru
          _
        %p319 = scmp.lt.s32.totalorder %s23, 1
        %s320 = scalar_select %p319, %s23, 1
        %s321 = scalar_lea.vmem %s2, %s320
        // Predicated region
        $region45: #{tpu_custom_call.1} parent=27 // pred_check
          %p322 = pneg %p105
        $region46: #{tpu_custom_call.1} parent=27 // pred_check_branch
          %324 = sbr.rel (%p322) target = $region48
        $region47: #{tpu_custom_call.1} parent=27 // pred_region
          _
        $region48: #{tpu_custom_call.1} parent=27 // pred_fallthru
          _
      $region28: #{tpu_custom_call.1} parent=5 // pred_fallthru
        _
      %p325 = scmp.le.s32.totalorder 2, %s14
      // Predicated region
      $region49: #{tpu_custom_call.1} parent=5 // pred_check
        %p326 = pneg %p325
      $region50: #{tpu_custom_call.1} parent=5 // pred_check_branch
        %328 = sbr.rel (%p326) target = $region52
      $region51: #{tpu_custom_call.1} parent=5 // pred_region
        %s329 = ssub.s32 %s14, 2
        // Predicated region
        $region53: #{tpu_custom_call.1} parent=51 // pred_check
          %p330 = pneg %p111
        $region54: #{tpu_custom_call.1} parent=51 // pred_check_branch
          %332 = sbr.rel (%p330) target = $region56
        $region55: #{tpu_custom_call.1} parent=51 // pred_region
          %p333 = scmp.lt.s32.totalorder %s25, 1
          %s334 = scalar_select %p333, %s25, 1
          %s335 = scalar_lea.vmem %s2, %s334
        $region56: #{tpu_custom_call.1} parent=51 // pred_fallthru
          _
      $region52: #{tpu_custom_call.1} parent=5 // pred_fallthru
        _
    $region6: #{tpu_custom_call.1} parent=1 // loop_footer
      %s18 = sadd.s32 1, %s14
    $region7: #{tpu_custom_call.1} parent=1 // loop_footer_branch
      %13 = sbr.rel target = $region3
    $region8: #{tpu_custom_call.1} parent=1 // loop_exit
      _
    %336 = vsyncpa [#allocation6], 1
    %s337 = scalar_lea.sflag [#allocation6], 1
    %338 = vsyncpa %s337, 1
    %339 = vsyncpa [#allocation8], 1
    %s340 = scalar_lea.sflag [#allocation8], 1
    %341 = vsyncpa %s340, 1

</llo_original>
